<compile_context>
chip_gen: v5e
topology: v5e:2x2
jax: 0.10.0
libtpu: 0.0.40
codegen_flags: <defaults>
</compile_context>

<pallas_src>
import functools

import jax
import jax.numpy as jnp
from jax.experimental import pallas as pl
from jax.experimental.pallas import tpu as pltpu


D = 28 * 28          # 784
ENC = 3
ENC_PAD = 128        # encoded output written lane-dense; padded cols are zero


def _round_up(n, m):
    return ((n + m - 1) // m) * m


def _linear(h, w_ref, b_ref, compute_dtype):
    # Matmul operands in compute_dtype (weights already stored in it);
    # accumulation and bias add in f32.
    return (
        jnp.dot(h.astype(compute_dtype), w_ref[...],
                preferred_element_type=jnp.float32)
        + b_ref[...]
    )


def autoencoder_kernel(
    x_ref,
    w1_ref, b1_ref, w2_ref, b2_ref, w3_ref, b3_ref, w4_ref, b4_ref,
    w5_ref, b5_ref, w6_ref, b6_ref, w7_ref, b7_ref, w8_ref, b8_ref,
    enc_ref, dec_ref,
    *, compute_dtype,
):
    h = x_ref[...]                                          # (bt, 784) f32

    # encoder: Linear -> Tanh (x3) -> Linear        (activations kept f32)
    h = jnp.tanh(_linear(h, w1_ref, b1_ref, compute_dtype))
    h = jnp.tanh(_linear(h, w2_ref, b2_ref, compute_dtype))
    h = jnp.tanh(_linear(h, w3_ref, b3_ref, compute_dtype))
    encoded = _linear(h, w4_ref, b4_ref, compute_dtype)     # (bt, 128); cols 3: == 0

    # decoder: Linear -> Tanh (x3) -> Linear -> Sigmoid
    d = jnp.tanh(_linear(encoded, w5_ref, b5_ref, compute_dtype))
    d = jnp.tanh(_linear(d, w6_ref, b6_ref, compute_dtype))
    d = jnp.tanh(_linear(d, w7_ref, b7_ref, compute_dtype))
    decoded = jax.nn.sigmoid(_linear(d, w8_ref, b8_ref, compute_dtype))  # (bt, 784)

    enc_ref[...] = encoded.astype(enc_ref.dtype)
    dec_ref[...] = decoded.astype(dec_ref.dtype)


def _prepare_params(params, compute_dtype):
    """Cast weights to compute_dtype; pad only the tiny encoded head to 128 lanes.

    Padded rows/cols are zero, so results in the valid lanes are exact.
    w1 (784,128), w8 (128,784), b8 (1,784) stay UNPADDED (lane padding of the
    big slabs was pure extra HBM traffic).
    """
    (w1, b1, w2, b2, w3, b3, w4, b4,
     w5, b5, w6, b6, w7, b7, w8, b8) = params
    w4p = jnp.pad(w4, ((0, 0), (0, ENC_PAD - ENC)))      # (12, 128)
    b4p = jnp.pad(b4, ((0, 0), (0, ENC_PAD - ENC)))      # (1, 128)
    w5p = jnp.pad(w5, ((0, ENC_PAD - ENC), (0, 0)))      # (128, 12)
    ws = [w1, w2, w3, w4p, w5p, w6, w7, w8]
    bs = [b1, b2, b3, b4p, b5, b6, b7, b8]
    ws = [w.astype(compute_dtype) for w in ws]
    bs = [b.astype(jnp.float32) for b in bs]
    out = []
    for w, b in zip(ws, bs):
        out.extend([w, b])
    return out


def _choose_tile(B, batch_tile):
    """Batch tile derived from B: multiple of 8, >=2 (even) grid steps for
    large batches (v7x megacore), minimal batch padding for awkward sizes."""
    B8 = _round_up(B, 8)
    bt_cap = max(8, _round_up(min(int(batch_tile), B8), 8))
    n_steps = pl.cdiv(B8, bt_cap)
    if B8 >= 512:
        n_steps = max(n_steps, 2)
        if n_steps % 2:                      # even step count -> both TCs busy
            n_steps += 1
    bt = max(8, _round_up(pl.cdiv(B8, n_steps), 8))
    B_pad = bt * pl.cdiv(B8, bt)
    return bt, B_pad


@functools.partial(jax.jit,
                   static_argnames=("batch_tile", "compute_dtype", "dec_dtype"))
def autoencoder_forward(x, params, *, batch_tile=1024,
                        compute_dtype=jnp.bfloat16, dec_dtype=jnp.float32):
    B, Din = x.shape
    assert Din == D

    bt, B_pad = _choose_tile(B, batch_tile)

    x_in = x.astype(jnp.float32)
    if B_pad != B:
        x_in = jnp.pad(x_in, ((0, B_pad - B), (0, 0)))   # only row padding

    padded_params = _prepare_params(params, compute_dtype)

    # Full-array (untiled) specs for parameters; same block every grid step,
    # so they stay resident in VMEM (no re-DMA across steps).
    def full_spec(arr):
        nd = arr.ndim
        return pl.BlockSpec(arr.shape, lambda i, _nd=nd: (0,) * _nd)

    param_specs = [full_spec(p) for p in padded_params]

    grid = (B_pad // bt,)
    x_spec = pl.BlockSpec((bt, D), lambda i: (i, 0))          # full 784 last dim
    enc_spec = pl.BlockSpec((bt, ENC_PAD), lambda i: (i, 0))
    dec_spec = pl.BlockSpec((bt, D), lambda i: (i, 0))

    # VMEM budget: double-buffered x/dec/enc tiles + (conservatively
    # double-buffered) resident params, with headroom; capped at 48 MiB so it
    # also fits v7x's 64 MiB physical VMEM.
    dec_isize = jnp.dtype(dec_dtype).itemsize
    param_bytes = sum(int(p.size) * p.dtype.itemsize for p in padded_params)
    tile_bytes = 2 * (bt * D * 4 + bt * D * dec_isize + bt * ENC_PAD * 4)
    vmem_limit = min(48 * 1024 * 1024,
                     max(32 * 1024 * 1024,
                         int(1.5 * (tile_bytes + 2 * param_bytes))))

    # Advisory cost hint for the XLA scheduler (unpadded traffic).
    flops_per_row = 2 * (D * 128 + 128 * 64 + 64 * 12 + 12 * 3
                         + 3 * 12 + 12 * 64 + 64 * 128 + 128 * D)
    trans_per_row = 128 + 64 + 12 + 12 + 64 + 128 + D    # 6x tanh + sigmoid
    cost = pl.CostEstimate(
        flops=B_pad * flops_per_row,
        transcendentals=B_pad * trans_per_row,
        bytes_accessed=(B_pad * D * 4                 # x read
                        + B_pad * ENC_PAD * 4         # encoded write
                        + B_pad * D * dec_isize       # decoded write
                        + param_bytes),
    )

    kernel = functools.partial(autoencoder_kernel, compute_dtype=compute_dtype)

    enc_pad, dec_pad = pl.pallas_call(
        kernel,
        out_shape=(
            jax.ShapeDtypeStruct((B_pad, ENC_PAD), jnp.float32),
            jax.ShapeDtypeStruct((B_pad, D), dec_dtype),
        ),
        grid_spec=pltpu.PrefetchScalarGridSpec(
            num_scalar_prefetch=0,
            grid=grid,
            in_specs=[x_spec] + param_specs,
            out_specs=[enc_spec, dec_spec],
        ),
        compiler_params=pltpu.CompilerParams(
            dimension_semantics=("parallel",),
            vmem_limit_bytes=vmem_limit,
        ),
        cost_estimate=cost,
    )(x_in, *padded_params)

    # Cheap post-ops only: tiny column slice for enc, row slice if batch padded.
    encoded = enc_pad[:B, :ENC]
    decoded = dec_pad[:B] if B_pad != B else dec_pad
    return encoded, decoded


def init_params(key):
    """Deterministic init matching PyTorch Linear shapes.

    PyTorch Linear(in, out) has W:(out, in), b:(out,).  We store W transposed
    as (in, out) and b as (1, out) for broadcasting in the kernel.
    """
    dims = [
        (D, 128), (128, 64), (64, 12), (12, 3),      # encoder
        (3, 12), (12, 64), (64, 128), (128, D),      # decoder
    ]
    params = []
    for (fan_in, fan_out) in dims:
        key, kw, kb = jax.random.split(key, 3)
        bound = 1.0 / jnp.sqrt(jnp.float32(fan_in))
        w = jax.random.uniform(kw, (fan_in, fan_out), jnp.float32,
                               -bound, bound)
        b = jax.random.uniform(kb, (1, fan_out), jnp.float32, -bound, bound)
        params.extend([w, b])
    return params


def reference_forward(x, params):
    """Plain-JAX reference for correctness check (unpadded params)."""
    (w1, b1, w2, b2, w3, b3, w4, b4,
     w5, b5, w6, b6, w7, b7, w8, b8) = params
    h = jnp.tanh(x @ w1 + b1)
    h = jnp.tanh(h @ w2 + b2)
    h = jnp.tanh(h @ w3 + b3)
    enc = h @ w4 + b4
    d = jnp.tanh(enc @ w5 + b5)
    d = jnp.tanh(d @ w6 + b6)
    d = jnp.tanh(d @ w7 + b7)
    dec = jax.nn.sigmoid(d @ w8 + b8)
    return enc, dec


if __name__ == "__main__":
    key = jax.random.PRNGKey(0)
    key, kx = jax.random.split(key)

    batch = 8
    x = jax.random.uniform(kx, (batch, D), jnp.float32)   # pixel-like [0, 1)
    params = init_params(key)

    enc_ref, dec_ref = reference_forward(x, params)

    # f32 matmul path (exact-ish) -- tile auto-clamps to the tiny demo batch.
    enc, dec = autoencoder_forward(x, params, compute_dtype=jnp.float32,
                                   dec_dtype=jnp.float32)
    enc, dec = jax.block_until_ready((enc, dec))
    assert enc.shape == (batch, ENC) and dec.shape == (batch, D)
    assert jnp.allclose(enc, enc_ref, atol=1e-5, rtol=1e-5)
    assert jnp.allclose(dec, dec_ref, atol=1e-5, rtol=1e-5)

    # Default fast path: bf16 matmul operands (all generations) + bf16 decoded
    # output (halves the dominant HBM write) -- loose tolerance.
    enc16, dec16 = autoencoder_forward(x, params,
                                       compute_dtype=jnp.bfloat16,
                                       dec_dtype=jnp.bfloat16)
    enc16, dec16 = jax.block_until_ready((enc16, dec16))
    assert dec16.dtype == jnp.bfloat16
    assert jnp.allclose(enc16, enc_ref, atol=5e-2, rtol=5e-2)
    assert jnp.allclose(dec16.astype(jnp.float32), dec_ref, atol=5e-2, rtol=5e-2)

    print("KERNEL_OK")
</pallas_src>

<mosaic_0001>
module attributes {stable_mosaic.version = 11 : i64} {
  func.func @autoencoder_kernel(%arg0: i32, %arg1: memref<8x784xf32, #tpu.memory_space<vmem>>, %arg2: memref<784x128xf32, #tpu.memory_space<vmem>>, %arg3: memref<1x128xf32, #tpu.memory_space<vmem>>, %arg4: memref<128x64xf32, #tpu.memory_space<vmem>>, %arg5: memref<1x64xf32, #tpu.memory_space<vmem>>, %arg6: memref<64x12xf32, #tpu.memory_space<vmem>>, %arg7: memref<1x12xf32, #tpu.memory_space<vmem>>, %arg8: memref<12x128xf32, #tpu.memory_space<vmem>>, %arg9: memref<1x128xf32, #tpu.memory_space<vmem>>, %arg10: memref<128x12xf32, #tpu.memory_space<vmem>>, %arg11: memref<1x12xf32, #tpu.memory_space<vmem>>, %arg12: memref<12x64xf32, #tpu.memory_space<vmem>>, %arg13: memref<1x64xf32, #tpu.memory_space<vmem>>, %arg14: memref<64x128xf32, #tpu.memory_space<vmem>>, %arg15: memref<1x128xf32, #tpu.memory_space<vmem>>, %arg16: memref<128x784xf32, #tpu.memory_space<vmem>>, %arg17: memref<1x784xf32, #tpu.memory_space<vmem>>, %arg18: memref<8x128xf32, #tpu.memory_space<vmem>>, %arg19: memref<8x784xf32, #tpu.memory_space<vmem>>) attributes {dimension_semantics = [#tpu.dimension_semantics<parallel>], iteration_bounds = array<i64: 1>, scalar_prefetch = 0 : i64, scratch_operands = 0 : i64, tpu.core_type = #tpu.core_type<tc>, window_params = [{transform_indices = @transform_0, window_bounds = array<i64: 8, 784>}, {pipeline_mode = #tpu.pipeline_mode<synchronous>, transform_indices = @transform_1, window_bounds = array<i64: 784, 128>}, {pipeline_mode = #tpu.pipeline_mode<synchronous>, transform_indices = @transform_2, window_bounds = array<i64: 1, 128>}, {pipeline_mode = #tpu.pipeline_mode<synchronous>, transform_indices = @transform_3, window_bounds = array<i64: 128, 64>}, {pipeline_mode = #tpu.pipeline_mode<synchronous>, transform_indices = @transform_4, window_bounds = array<i64: 1, 64>}, {pipeline_mode = #tpu.pipeline_mode<synchronous>, transform_indices = @transform_5, window_bounds = array<i64: 64, 12>}, {pipeline_mode = #tpu.pipeline_mode<synchronous>, transform_indices = @transform_6, window_bounds = array<i64: 1, 12>}, {pipeline_mode = #tpu.pipeline_mode<synchronous>, transform_indices = @transform_7, window_bounds = array<i64: 12, 128>}, {pipeline_mode = #tpu.pipeline_mode<synchronous>, transform_indices = @transform_8, window_bounds = array<i64: 1, 128>}, {pipeline_mode = #tpu.pipeline_mode<synchronous>, transform_indices = @transform_9, window_bounds = array<i64: 128, 12>}, {pipeline_mode = #tpu.pipeline_mode<synchronous>, transform_indices = @transform_10, window_bounds = array<i64: 1, 12>}, {pipeline_mode = #tpu.pipeline_mode<synchronous>, transform_indices = @transform_11, window_bounds = array<i64: 12, 64>}, {pipeline_mode = #tpu.pipeline_mode<synchronous>, transform_indices = @transform_12, window_bounds = array<i64: 1, 64>}, {pipeline_mode = #tpu.pipeline_mode<synchronous>, transform_indices = @transform_13, window_bounds = array<i64: 64, 128>}, {pipeline_mode = #tpu.pipeline_mode<synchronous>, transform_indices = @transform_14, window_bounds = array<i64: 1, 128>}, {pipeline_mode = #tpu.pipeline_mode<synchronous>, transform_indices = @transform_15, window_bounds = array<i64: 128, 784>}, {pipeline_mode = #tpu.pipeline_mode<synchronous>, transform_indices = @transform_16, window_bounds = array<i64: 1, 784>}, {transform_indices = @transform_17, window_bounds = array<i64: 8, 128>}, {transform_indices = @transform_18, window_bounds = array<i64: 8, 784>}]} {
    %c0 = arith.constant 0 : index
    %c0_0 = arith.constant 0 : index
    %0 = vector.load %arg1[%c0, %c0_0] : memref<8x784xf32, #tpu.memory_space<vmem>>, vector<8x784xf32>
    %c0_1 = arith.constant 0 : index
    %c0_2 = arith.constant 0 : index
    %1 = vector.load %arg2[%c0_1, %c0_2] : memref<784x128xf32, #tpu.memory_space<vmem>>, vector<784x128xf32>
    %cst = arith.constant dense<0.000000e+00> : vector<8x128xf32>
    %2 = tpu.matmul %0, %1, %cst {dimension_numbers = #tpu.dot_dimension_numbers<[1], [0], [0], [1], [0, 0, 1, 1], [], []>} : vector<8x784xf32>, vector<784x128xf32>, vector<8x128xf32> -> vector<8x128xf32>
    %c0_3 = arith.constant 0 : index
    %c0_4 = arith.constant 0 : index
    %3 = vector.load %arg3[%c0_3, %c0_4] : memref<1x128xf32, #tpu.memory_space<vmem>>, vector<1x128xf32>
    %4 = vector.broadcast %3 : vector<1x128xf32> to vector<8x128xf32>
    %5 = arith.addf %2, %4 : vector<8x128xf32>
    %6 = math.tanh %5 : vector<8x128xf32>
    %c0_5 = arith.constant 0 : index
    %c0_6 = arith.constant 0 : index
    %7 = vector.load %arg4[%c0_5, %c0_6] : memref<128x64xf32, #tpu.memory_space<vmem>>, vector<128x64xf32>
    %cst_7 = arith.constant dense<0.000000e+00> : vector<8x64xf32>
    %8 = tpu.matmul %6, %7, %cst_7 {dimension_numbers = #tpu.dot_dimension_numbers<[1], [0], [0], [1], [0, 0, 1, 1], [], []>} : vector<8x128xf32>, vector<128x64xf32>, vector<8x64xf32> -> vector<8x64xf32>
    %c0_8 = arith.constant 0 : index
    %c0_9 = arith.constant 0 : index
    %9 = vector.load %arg5[%c0_8, %c0_9] : memref<1x64xf32, #tpu.memory_space<vmem>>, vector<1x64xf32>
    %10 = vector.broadcast %9 : vector<1x64xf32> to vector<8x64xf32>
    %11 = arith.addf %8, %10 : vector<8x64xf32>
    %12 = math.tanh %11 : vector<8x64xf32>
    %c0_10 = arith.constant 0 : index
    %c0_11 = arith.constant 0 : index
    %13 = vector.load %arg6[%c0_10, %c0_11] : memref<64x12xf32, #tpu.memory_space<vmem>>, vector<64x12xf32>
    %cst_12 = arith.constant dense<0.000000e+00> : vector<8x12xf32>
    %14 = tpu.matmul %12, %13, %cst_12 {dimension_numbers = #tpu.dot_dimension_numbers<[1], [0], [0], [1], [0, 0, 1, 1], [], []>} : vector<8x64xf32>, vector<64x12xf32>, vector<8x12xf32> -> vector<8x12xf32>
    %c0_13 = arith.constant 0 : index
    %c0_14 = arith.constant 0 : index
    %15 = vector.load %arg7[%c0_13, %c0_14] : memref<1x12xf32, #tpu.memory_space<vmem>>, vector<1x12xf32>
    %16 = vector.broadcast %15 : vector<1x12xf32> to vector<8x12xf32>
    %17 = arith.addf %14, %16 : vector<8x12xf32>
    %18 = math.tanh %17 : vector<8x12xf32>
    %c0_15 = arith.constant 0 : index
    %c0_16 = arith.constant 0 : index
    %19 = vector.load %arg8[%c0_15, %c0_16] : memref<12x128xf32, #tpu.memory_space<vmem>>, vector<12x128xf32>
    %cst_17 = arith.constant dense<0.000000e+00> : vector<8x128xf32>
    %20 = tpu.matmul %18, %19, %cst_17 {dimension_numbers = #tpu.dot_dimension_numbers<[1], [0], [0], [1], [0, 0, 1, 1], [], []>} : vector<8x12xf32>, vector<12x128xf32>, vector<8x128xf32> -> vector<8x128xf32>
    %c0_18 = arith.constant 0 : index
    %c0_19 = arith.constant 0 : index
    %21 = vector.load %arg9[%c0_18, %c0_19] : memref<1x128xf32, #tpu.memory_space<vmem>>, vector<1x128xf32>
    %22 = vector.broadcast %21 : vector<1x128xf32> to vector<8x128xf32>
    %23 = arith.addf %20, %22 : vector<8x128xf32>
    %c0_20 = arith.constant 0 : index
    %c0_21 = arith.constant 0 : index
    %24 = vector.load %arg10[%c0_20, %c0_21] : memref<128x12xf32, #tpu.memory_space<vmem>>, vector<128x12xf32>
    %cst_22 = arith.constant dense<0.000000e+00> : vector<8x12xf32>
    %25 = tpu.matmul %23, %24, %cst_22 {dimension_numbers = #tpu.dot_dimension_numbers<[1], [0], [0], [1], [0, 0, 1, 1], [], []>} : vector<8x128xf32>, vector<128x12xf32>, vector<8x12xf32> -> vector<8x12xf32>
    %c0_23 = arith.constant 0 : index
    %c0_24 = arith.constant 0 : index
    %26 = vector.load %arg11[%c0_23, %c0_24] : memref<1x12xf32, #tpu.memory_space<vmem>>, vector<1x12xf32>
    %27 = vector.broadcast %26 : vector<1x12xf32> to vector<8x12xf32>
    %28 = arith.addf %25, %27 : vector<8x12xf32>
    %29 = math.tanh %28 : vector<8x12xf32>
    %c0_25 = arith.constant 0 : index
    %c0_26 = arith.constant 0 : index
    %30 = vector.load %arg12[%c0_25, %c0_26] : memref<12x64xf32, #tpu.memory_space<vmem>>, vector<12x64xf32>
    %cst_27 = arith.constant dense<0.000000e+00> : vector<8x64xf32>
    %31 = tpu.matmul %29, %30, %cst_27 {dimension_numbers = #tpu.dot_dimension_numbers<[1], [0], [0], [1], [0, 0, 1, 1], [], []>} : vector<8x12xf32>, vector<12x64xf32>, vector<8x64xf32> -> vector<8x64xf32>
    %c0_28 = arith.constant 0 : index
    %c0_29 = arith.constant 0 : index
    %32 = vector.load %arg13[%c0_28, %c0_29] : memref<1x64xf32, #tpu.memory_space<vmem>>, vector<1x64xf32>
    %33 = vector.broadcast %32 : vector<1x64xf32> to vector<8x64xf32>
    %34 = arith.addf %31, %33 : vector<8x64xf32>
    %35 = math.tanh %34 : vector<8x64xf32>
    %c0_30 = arith.constant 0 : index
    %c0_31 = arith.constant 0 : index
    %36 = vector.load %arg14[%c0_30, %c0_31] : memref<64x128xf32, #tpu.memory_space<vmem>>, vector<64x128xf32>
    %cst_32 = arith.constant dense<0.000000e+00> : vector<8x128xf32>
    %37 = tpu.matmul %35, %36, %cst_32 {dimension_numbers = #tpu.dot_dimension_numbers<[1], [0], [0], [1], [0, 0, 1, 1], [], []>} : vector<8x64xf32>, vector<64x128xf32>, vector<8x128xf32> -> vector<8x128xf32>
    %c0_33 = arith.constant 0 : index
    %c0_34 = arith.constant 0 : index
    %38 = vector.load %arg15[%c0_33, %c0_34] : memref<1x128xf32, #tpu.memory_space<vmem>>, vector<1x128xf32>
    %39 = vector.broadcast %38 : vector<1x128xf32> to vector<8x128xf32>
    %40 = arith.addf %37, %39 : vector<8x128xf32>
    %41 = math.tanh %40 : vector<8x128xf32>
    %c0_35 = arith.constant 0 : index
    %c0_36 = arith.constant 0 : index
    %42 = vector.load %arg16[%c0_35, %c0_36] : memref<128x784xf32, #tpu.memory_space<vmem>>, vector<128x784xf32>
    %cst_37 = arith.constant dense<0.000000e+00> : vector<8x784xf32>
    %43 = tpu.matmul %41, %42, %cst_37 {dimension_numbers = #tpu.dot_dimension_numbers<[1], [0], [0], [1], [0, 0, 1, 1], [], []>} : vector<8x128xf32>, vector<128x784xf32>, vector<8x784xf32> -> vector<8x784xf32>
    %c0_38 = arith.constant 0 : index
    %c0_39 = arith.constant 0 : index
    %44 = vector.load %arg17[%c0_38, %c0_39] : memref<1x784xf32, #tpu.memory_space<vmem>>, vector<1x784xf32>
    %45 = vector.broadcast %44 : vector<1x784xf32> to vector<8x784xf32>
    %46 = arith.addf %43, %45 : vector<8x784xf32>
    %47 = arith.negf %46 : vector<8x784xf32>
    %48 = math.exp %47 : vector<8x784xf32>
    %cst_40 = arith.constant 1.000000e+00 : f32
    %49 = vector.broadcast %cst_40 : f32 to vector<8x784xf32>
    %50 = arith.addf %49, %48 : vector<8x784xf32>
    %51 = arith.divf %49, %50 : vector<8x784xf32>
    %c0_41 = arith.constant 0 : index
    %c0_42 = arith.constant 0 : index
    %52 = vector.load %arg18[%c0_41, %c0_42] : memref<8x128xf32, #tpu.memory_space<vmem>>, vector<8x128xf32>
    tpu.vector_store %arg18[%c0_41, %c0_42], %23 {strides = array<i32>} : memref<8x128xf32, #tpu.memory_space<vmem>>, vector<8x128xf32>,
    %c0_43 = arith.constant 0 : index
    %c0_44 = arith.constant 0 : index
    %53 = vector.load %arg19[%c0_43, %c0_44] : memref<8x784xf32, #tpu.memory_space<vmem>>, vector<8x784xf32>
    tpu.vector_store %arg19[%c0_43, %c0_44], %51 {strides = array<i32>} : memref<8x784xf32, #tpu.memory_space<vmem>>, vector<8x784xf32>,
    return
  }
  func.func @transform_0(%arg0: i32) -> (i32, i32) {
    %c0_i32 = arith.constant 0 : i32
    %c0_i32_0 = arith.constant 0 : i32
    return %arg0, %c0_i32 : i32, i32
  }
  func.func @transform_1(%arg0: i32) -> (i32, i32) {
    %c0_i32 = arith.constant 0 : i32
    %c0_i32_0 = arith.constant 0 : i32
    %c0_i32_1 = arith.constant 0 : i32
    return %c0_i32, %c0_i32_0 : i32, i32
  }
  func.func @transform_2(%arg0: i32) -> (i32, i32) {
    %c0_i32 = arith.constant 0 : i32
    %c0_i32_0 = arith.constant 0 : i32
    %c0_i32_1 = arith.constant 0 : i32
    return %c0_i32, %c0_i32_0 : i32, i32
  }
  func.func @transform_3(%arg0: i32) -> (i32, i32) {
    %c0_i32 = arith.constant 0 : i32
    %c0_i32_0 = arith.constant 0 : i32
    %c0_i32_1 = arith.constant 0 : i32
    return %c0_i32, %c0_i32_0 : i32, i32
  }
  func.func @transform_4(%arg0: i32) -> (i32, i32) {
    %c0_i32 = arith.constant 0 : i32
    %c0_i32_0 = arith.constant 0 : i32
    %c0_i32_1 = arith.constant 0 : i32
    return %c0_i32, %c0_i32_0 : i32, i32
  }
  func.func @transform_5(%arg0: i32) -> (i32, i32) {
    %c0_i32 = arith.constant 0 : i32
    %c0_i32_0 = arith.constant 0 : i32
    %c0_i32_1 = arith.constant 0 : i32
    return %c0_i32, %c0_i32_0 : i32, i32
  }
  func.func @transform_6(%arg0: i32) -> (i32, i32) {
    %c0_i32 = arith.constant 0 : i32
    %c0_i32_0 = arith.constant 0 : i32
    %c0_i32_1 = arith.constant 0 : i32
    return %c0_i32, %c0_i32_0 : i32, i32
  }
  func.func @transform_7(%arg0: i32) -> (i32, i32) {
    %c0_i32 = arith.constant 0 : i32
    %c0_i32_0 = arith.constant 0 : i32
    %c0_i32_1 = arith.constant 0 : i32
    return %c0_i32, %c0_i32_0 : i32, i32
  }
  func.func @transform_8(%arg0: i32) -> (i32, i32) {
    %c0_i32 = arith.constant 0 : i32
    %c0_i32_0 = arith.constant 0 : i32
    %c0_i32_1 = arith.constant 0 : i32
    return %c0_i32, %c0_i32_0 : i32, i32
  }
  func.func @transform_9(%arg0: i32) -> (i32, i32) {
    %c0_i32 = arith.constant 0 : i32
    %c0_i32_0 = arith.constant 0 : i32
    %c0_i32_1 = arith.constant 0 : i32
    return %c0_i32, %c0_i32_0 : i32, i32
  }
  func.func @transform_10(%arg0: i32) -> (i32, i32) {
    %c0_i32 = arith.constant 0 : i32
    %c0_i32_0 = arith.constant 0 : i32
    %c0_i32_1 = arith.constant 0 : i32
    return %c0_i32, %c0_i32_0 : i32, i32
  }
  func.func @transform_11(%arg0: i32) -> (i32, i32) {
    %c0_i32 = arith.constant 0 : i32
    %c0_i32_0 = arith.constant 0 : i32
    %c0_i32_1 = arith.constant 0 : i32
    return %c0_i32, %c0_i32_0 : i32, i32
  }
  func.func @transform_12(%arg0: i32) -> (i32, i32) {
    %c0_i32 = arith.constant 0 : i32
    %c0_i32_0 = arith.constant 0 : i32
    %c0_i32_1 = arith.constant 0 : i32
    return %c0_i32, %c0_i32_0 : i32, i32
  }
  func.func @transform_13(%arg0: i32) -> (i32, i32) {
    %c0_i32 = arith.constant 0 : i32
    %c0_i32_0 = arith.constant 0 : i32
    %c0_i32_1 = arith.constant 0 : i32
    return %c0_i32, %c0_i32_0 : i32, i32
  }
  func.func @transform_14(%arg0: i32) -> (i32, i32) {
    %c0_i32 = arith.constant 0 : i32
    %c0_i32_0 = arith.constant 0 : i32
    %c0_i32_1 = arith.constant 0 : i32
    return %c0_i32, %c0_i32_0 : i32, i32
  }
  func.func @transform_15(%arg0: i32) -> (i32, i32) {
    %c0_i32 = arith.constant 0 : i32
    %c0_i32_0 = arith.constant 0 : i32
    %c0_i32_1 = arith.constant 0 : i32
    return %c0_i32, %c0_i32_0 : i32, i32
  }
  func.func @transform_16(%arg0: i32) -> (i32, i32) {
    %c0_i32 = arith.constant 0 : i32
    %c0_i32_0 = arith.constant 0 : i32
    %c0_i32_1 = arith.constant 0 : i32
    return %c0_i32, %c0_i32_0 : i32, i32
  }
  func.func @transform_17(%arg0: i32) -> (i32, i32) {
    %c0_i32 = arith.constant 0 : i32
    %c0_i32_0 = arith.constant 0 : i32
    return %arg0, %c0_i32 : i32, i32
  }
  func.func @transform_18(%arg0: i32) -> (i32, i32) {
    %c0_i32 = arith.constant 0 : i32
    %c0_i32_0 = arith.constant 0 : i32
    return %arg0, %c0_i32 : i32, i32
  }
}

</mosaic_0001>

<llo_original>
// kernel: autoencoder_forward.1
$region0: #{autoencoder_forward.1}
  #allocation0 [shape = 'u32[]', space=smem, size = 0x4, offset = 0x4, fixed_abs, tag = 'smem constant byte address 0x4 - core index']
  #allocation1 [shape = 'u32[72,128]{1,0:T(1,128)}', space=vmem, size = 0x9000, scoped, tag = 'internal scratch']
  %s0 = inlined_call_operand.vmem [shape: f32[8,784], index: 0, kind: input, shape index: {}]
  %s1 = inlined_call_operand.vmem [shape: f32[784,128], index: 1, kind: input, shape index: {}]
  %s2 = inlined_call_operand.vmem [shape: f32[1,128], index: 2, kind: input, shape index: {}]
  %s3 = inlined_call_operand.vmem [shape: f32[128,64], index: 3, kind: input, shape index: {}]
  %s4 = inlined_call_operand.vmem [shape: f32[1,64], index: 4, kind: input, shape index: {}]
  %s5 = inlined_call_operand.vmem [shape: f32[64,12], index: 5, kind: input, shape index: {}]
  %s6 = inlined_call_operand.vmem [shape: f32[1,12], index: 6, kind: input, shape index: {}]
  %s7 = inlined_call_operand.vmem [shape: f32[12,128], index: 7, kind: input, shape index: {}]
  %s8 = inlined_call_operand.vmem [shape: f32[1,128], index: 8, kind: input, shape index: {}]
  %s9 = inlined_call_operand.vmem [shape: f32[128,12], index: 9, kind: input, shape index: {}]
  %s10 = inlined_call_operand.vmem [shape: f32[1,12], index: 10, kind: input, shape index: {}]
  %s11 = inlined_call_operand.vmem [shape: f32[12,64], index: 11, kind: input, shape index: {}]
  %s12 = inlined_call_operand.vmem [shape: f32[1,64], index: 12, kind: input, shape index: {}]
  %s13 = inlined_call_operand.vmem [shape: f32[64,128], index: 13, kind: input, shape index: {}]
  %s14 = inlined_call_operand.vmem [shape: f32[1,128], index: 14, kind: input, shape index: {}]
  %s15 = inlined_call_operand.vmem [shape: f32[128,784], index: 15, kind: input, shape index: {}]
  %s16 = inlined_call_operand.vmem [shape: f32[1,784], index: 16, kind: input, shape index: {}]
  %s17 = inlined_call_operand.vmem [shape: f32[8,128], index: 17, kind: output, shape index: {0}]
  %s18 = inlined_call_operand.hbm [shape: f32[8,784], index: 18, kind: output, shape index: {1}]
  %19 = xla_tuple %s17, %s18
  %s20 = sld [smem:[#allocation0]]
  $region86: #{autoencoder_forward.1} parent=0
    _
  %s22 = ssub.s32 1, %s20
  %s23 = scalar_select 0, %s22, %s20
  $region1: #{autoencoder_forward.1} parent=0
    #allocation2 [shape = 'u8[28672]{0}', space=vmem, size = 0x7000, scoped, tag = 'output window, operand 1, single buffered']
    #allocation3 [shape = 's32[1]{0}', space=sflag, size = 0x4, scoped, tag = 'scoped memory for autoencoder_forward.1']
    %24 = vsyncpa [#allocation3], 0
    // Predicated region
    $region2: #{autoencoder_forward.1} parent=1 // pred_check
      _
    $region3: #{autoencoder_forward.1} parent=1 // pred_check_branch
      %26 = sbr.rel (0) target = $region5
    $region4: #{autoencoder_forward.1} parent=1 // pred_region
      _
    $region5: #{autoencoder_forward.1} parent=1 // pred_fallthru
      _
    // Predicated region
    $region6: #{autoencoder_forward.1} parent=1 // pred_check
      _
    $region7: #{autoencoder_forward.1} parent=1 // pred_check_branch
      %28 = sbr.rel (0) target = $region9
    $region8: #{autoencoder_forward.1} parent=1 // pred_region
      _
    $region9: #{autoencoder_forward.1} parent=1 // pred_fallthru
      _
    // Predicated region
    $region10: #{autoencoder_forward.1} parent=1 // pred_check
      _
    $region11: #{autoencoder_forward.1} parent=1 // pred_check_branch
      %30 = sbr.rel (0) target = $region13
    $region12: #{autoencoder_forward.1} parent=1 // pred_region
      _
    $region13: #{autoencoder_forward.1} parent=1 // pred_fallthru
      _
    // Predicated region
    $region14: #{autoencoder_forward.1} parent=1 // pred_check
      _
    $region15: #{autoencoder_forward.1} parent=1 // pred_check_branch
      %32 = sbr.rel (0) target = $region17
    $region16: #{autoencoder_forward.1} parent=1 // pred_region
      _
    $region17: #{autoencoder_forward.1} parent=1 // pred_fallthru
      _
    // Predicated region
    $region18: #{autoencoder_forward.1} parent=1 // pred_check
      _
    $region19: #{autoencoder_forward.1} parent=1 // pred_check_branch
      %34 = sbr.rel (0) target = $region21
    $region20: #{autoencoder_forward.1} parent=1 // pred_region
      _
    $region21: #{autoencoder_forward.1} parent=1 // pred_fallthru
      _
    // Predicated region
    $region22: #{autoencoder_forward.1} parent=1 // pred_check
      _
    $region23: #{autoencoder_forward.1} parent=1 // pred_check_branch
      %36 = sbr.rel (0) target = $region25
    $region24: #{autoencoder_forward.1} parent=1 // pred_region
      _
    $region25: #{autoencoder_forward.1} parent=1 // pred_fallthru
      _
    // Predicated region
    $region26: #{autoencoder_forward.1} parent=1 // pred_check
      _
    $region27: #{autoencoder_forward.1} parent=1 // pred_check_branch
      %38 = sbr.rel (0) target = $region29
    $region28: #{autoencoder_forward.1} parent=1 // pred_region
      _
    $region29: #{autoencoder_forward.1} parent=1 // pred_fallthru
      _
    // Predicated region
    $region30: #{autoencoder_forward.1} parent=1 // pred_check
      _
    $region31: #{autoencoder_forward.1} parent=1 // pred_check_branch
      %40 = sbr.rel (0) target = $region33
    $region32: #{autoencoder_forward.1} parent=1 // pred_region
      _
    $region33: #{autoencoder_forward.1} parent=1 // pred_fallthru
      _
    // Predicated region
    $region34: #{autoencoder_forward.1} parent=1 // pred_check
      _
    $region35: #{autoencoder_forward.1} parent=1 // pred_check_branch
      %42 = sbr.rel (0) target = $region37
    $region36: #{autoencoder_forward.1} parent=1 // pred_region
      _
    $region37: #{autoencoder_forward.1} parent=1 // pred_fallthru
      _
    // Predicated region
    $region38: #{autoencoder_forward.1} parent=1 // pred_check
      _
    $region39: #{autoencoder_forward.1} parent=1 // pred_check_branch
      %44 = sbr.rel (0) target = $region41
    $region40: #{autoencoder_forward.1} parent=1 // pred_region
      _
    $region41: #{autoencoder_forward.1} parent=1 // pred_fallthru
      _
    // Predicated region
    $region42: #{autoencoder_forward.1} parent=1 // pred_check
      _
    $region43: #{autoencoder_forward.1} parent=1 // pred_check_branch
      %46 = sbr.rel (0) target = $region45
    $region44: #{autoencoder_forward.1} parent=1 // pred_region
      _
    $region45: #{autoencoder_forward.1} parent=1 // pred_fallthru
      _
    // Predicated region
    $region46: #{autoencoder_forward.1} parent=1 // pred_check
      _
    $region47: #{autoencoder_forward.1} parent=1 // pred_check_branch
      %48 = sbr.rel (0) target = $region49
    $region48: #{autoencoder_forward.1} parent=1 // pred_region
      _
    $region49: #{autoencoder_forward.1} parent=1 // pred_fallthru
      _
    // Predicated region
    $region50: #{autoencoder_forward.1} parent=1 // pred_check
      _
    $region51: #{autoencoder_forward.1} parent=1 // pred_check_branch
      %50 = sbr.rel (0) target = $region53
    $region52: #{autoencoder_forward.1} parent=1 // pred_region
      _
    $region53: #{autoencoder_forward.1} parent=1 // pred_fallthru
      _
    // Predicated region
    $region54: #{autoencoder_forward.1} parent=1 // pred_check
      _
    $region55: #{autoencoder_forward.1} parent=1 // pred_check_branch
      %52 = sbr.rel (0) target = $region57
    $region56: #{autoencoder_forward.1} parent=1 // pred_region
      _
    $region57: #{autoencoder_forward.1} parent=1 // pred_fallthru
      _
    // Predicated region
    $region58: #{autoencoder_forward.1} parent=1 // pred_check
      _
    $region59: #{autoencoder_forward.1} parent=1 // pred_check_branch
      %54 = sbr.rel (0) target = $region61
    $region60: #{autoencoder_forward.1} parent=1 // pred_region
      _
    $region61: #{autoencoder_forward.1} parent=1 // pred_fallthru
      _
    // Predicated region
    $region62: #{autoencoder_forward.1} parent=1 // pred_check
      _
    $region63: #{autoencoder_forward.1} parent=1 // pred_check_branch
      %56 = sbr.rel (0) target = $region65
    $region64: #{autoencoder_forward.1} parent=1 // pred_region
      _
    $region65: #{autoencoder_forward.1} parent=1 // pred_fallthru
      _
    // Predicated region
    $region66: #{autoencoder_forward.1} parent=1 // pred_check
      _
    $region67: #{autoencoder_forward.1} parent=1 // pred_check_branch
      %58 = sbr.rel (0) target = $region69
    $region68: #{autoencoder_forward.1} parent=1 // pred_region
      _
    $region69: #{autoencoder_forward.1} parent=1 // pred_fallthru
      _
    %v59 = vld [vmem:[%s0] sm:$0xff]
    %v60 = vld [vmem:[%s0 + $0x8] sm:$0xff]
    %v61 = vld [vmem:[%s0 + $0x10] sm:$0xff]
    %v62 = vld [vmem:[%s0 + $0x18] sm:$0xff]
    %v63 = vld [vmem:[%s0 + $0x20] sm:$0xff]
    %v64 = vld [vmem:[%s0 + $0x28] sm:$0xff]
    %v65 = vld [vmem:[%s0 + $0x30] sm:$0xff]
    %v66 = vld [vmem:[%s1] sm:$0xff]
    %v67 = vld [vmem:[%s1 + $0x8] sm:$0xff]
    %v68 = vld [vmem:[%s1 + $0x10] sm:$0xff]
    %v69 = vld [vmem:[%s1 + $0x18] sm:$0xff]
    %v70 = vld [vmem:[%s1 + $0x20] sm:$0xff]
    %v71 = vld [vmem:[%s1 + $0x28] sm:$0xff]
    %v72 = vld [vmem:[%s1 + $0x30] sm:$0xff]
    %v73 = vld [vmem:[%s1 + $0x38] sm:$0xff]
    %v74 = vld [vmem:[%s1 + $0x40] sm:$0xff]
    %v75 = vld [vmem:[%s1 + $0x48] sm:$0xff]
    %v76 = vld [vmem:[%s1 + $0x50] sm:$0xff]
    %v77 = vld [vmem:[%s1 + $0x58] sm:$0xff]
    %v78 = vld [vmem:[%s1 + $0x60] sm:$0xff]
    %v79 = vld [vmem:[%s1 + $0x68] sm:$0xff]
    %v80 = vld [vmem:[%s1 + $0x70] sm:$0xff]
    %v81 = vld [vmem:[%s1 + $0x78] sm:$0xff]
    %v82 = vld [vmem:[%s1 + $0x80] sm:$0xff]
    %v83 = vld [vmem:[%s1 + $0x88] sm:$0xff]
    %v84 = vld [vmem:[%s1 + $0x90] sm:$0xff]
    %v85 = vld [vmem:[%s1 + $0x98] sm:$0xff]
    %v86 = vld [vmem:[%s1 + $0xa0] sm:$0xff]
    %v87 = vld [vmem:[%s1 + $0xa8] sm:$0xff]
    %v88 = vld [vmem:[%s1 + $0xb0] sm:$0xff]
    %v89 = vld [vmem:[%s1 + $0xb8] sm:$0xff]
    %v90 = vld [vmem:[%s1 + $0xc0] sm:$0xff]
    %v91 = vld [vmem:[%s1 + $0xc8] sm:$0xff]
    %v92 = vld [vmem:[%s1 + $0xd0] sm:$0xff]
    %v93 = vld [vmem:[%s1 + $0xd8] sm:$0xff]
    %v94 = vld [vmem:[%s1 + $0xe0] sm:$0xff]
    %v95 = vld [vmem:[%s1 + $0xe8] sm:$0xff]
    %v96 = vld [vmem:[%s1 + $0xf0] sm:$0xff]
    %v97 = vld [vmem:[%s1 + $0xf8] sm:$0xff]
    %v98 = vld [vmem:[%s1 + $0x100] sm:$0xff]
    %v99 = vld [vmem:[%s1 + $0x108] sm:$0xff]
    %v100 = vld [vmem:[%s1 + $0x110] sm:$0xff]
    %v101 = vld [vmem:[%s1 + $0x118] sm:$0xff]
    %v102 = vld [vmem:[%s1 + $0x120] sm:$0xff]
    %v103 = vld [vmem:[%s1 + $0x128] sm:$0xff]
    %v104 = vld [vmem:[%s1 + $0x130] sm:$0xff]
    %v105 = vld [vmem:[%s1 + $0x138] sm:$0xff]
    %v106 = vld [vmem:[%s1 + $0x140] sm:$0xff]
    %v107 = vld [vmem:[%s1 + $0x148] sm:$0xff]
    %v108 = vld [vmem:[%s1 + $0x150] sm:$0xff]
    %v109 = vld [vmem:[%s1 + $0x158] sm:$0xff]
    %v110 = vld [vmem:[%s1 + $0x160] sm:$0xff]
    %v111 = vld [vmem:[%s1 + $0x168] sm:$0xff]
    %v112 = vld [vmem:[%s1 + $0x170] sm:$0xff]
    %v113 = vld [vmem:[%s1 + $0x178] sm:$0xff]
    %v114 = vld [vmem:[%s1 + $0x180] sm:$0xff]
    %v115 = vld [vmem:[%s1 + $0x188] sm:$0xff]
    %v116 = vld [vmem:[%s1 + $0x190] sm:$0xff]
    %v117 = vld [vmem:[%s1 + $0x198] sm:$0xff]
    %v118 = vld [vmem:[%s1 + $0x1a0] sm:$0xff]
    %v119 = vld [vmem:[%s1 + $0x1a8] sm:$0xff]
    %v120 = vld [vmem:[%s1 + $0x1b0] sm:$0xff]
    %v121 = vld [vmem:[%s1 + $0x1b8] sm:$0xff]
    %v122 = vld [vmem:[%s1 + $0x1c0] sm:$0xff]
    %v123 = vld [vmem:[%s1 + $0x1c8] sm:$0xff]
    %v124 = vld [vmem:[%s1 + $0x1d0] sm:$0xff]
    %v125 = vld [vmem:[%s1 + $0x1d8] sm:$0xff]
    %v126 = vld [vmem:[%s1 + $0x1e0] sm:$0xff]
    %v127 = vld [vmem:[%s1 + $0x1e8] sm:$0xff]
    %v128 = vld [vmem:[%s1 + $0x1f0] sm:$0xff]
    %v129 = vld [vmem:[%s1 + $0x1f8] sm:$0xff]
    %v130 = vld [vmem:[%s1 + $0x200] sm:$0xff]
    %v131 = vld [vmem:[%s1 + $0x208] sm:$0xff]
    %v132 = vld [vmem:[%s1 + $0x210] sm:$0xff]
    %v133 = vld [vmem:[%s1 + $0x218] sm:$0xff]
    %v134 = vld [vmem:[%s1 + $0x220] sm:$0xff]
    %v135 = vld [vmem:[%s1 + $0x228] sm:$0xff]
    %v136 = vld [vmem:[%s1 + $0x230] sm:$0xff]
    %v137 = vld [vmem:[%s1 + $0x238] sm:$0xff]
    %v138 = vld [vmem:[%s1 + $0x240] sm:$0xff]
    %v139 = vld [vmem:[%s1 + $0x248] sm:$0xff]
    %v140 = vld [vmem:[%s1 + $0x250] sm:$0xff]
    %v141 = vld [vmem:[%s1 + $0x258] sm:$0xff]
    %v142 = vld [vmem:[%s1 + $0x260] sm:$0xff]
    %v143 = vld [vmem:[%s1 + $0x268] sm:$0xff]
    %v144 = vld [vmem:[%s1 + $0x270] sm:$0xff]
    %v145 = vld [vmem:[%s1 + $0x278] sm:$0xff]
    %v146 = vld [vmem:[%s1 + $0x280] sm:$0xff]
    %v147 = vld [vmem:[%s1 + $0x288] sm:$0xff]
    %v148 = vld [vmem:[%s1 + $0x290] sm:$0xff]
    %v149 = vld [vmem:[%s1 + $0x298] sm:$0xff]
    %v150 = vld [vmem:[%s1 + $0x2a0] sm:$0xff]
    %v151 = vld [vmem:[%s1 + $0x2a8] sm:$0xff]
    %v152 = vld [vmem:[%s1 + $0x2b0] sm:$0xff]
    %v153 = vld [vmem:[%s1 + $0x2b8] sm:$0xff]
    %v154 = vld [vmem:[%s1 + $0x2c0] sm:$0xff]
    %v155 = vld [vmem:[%s1 + $0x2c8] sm:$0xff]
    %v156 = vld [vmem:[%s1 + $0x2d0] sm:$0xff]
    %v157 = vld [vmem:[%s1 + $0x2d8] sm:$0xff]
    %v158 = vld [vmem:[%s1 + $0x2e0] sm:$0xff]
    %v159 = vld [vmem:[%s1 + $0x2e8] sm:$0xff]
    %v160 = vld [vmem:[%s1 + $0x2f0] sm:$0xff]
    %v161 = vld [vmem:[%s1 + $0x2f8] sm:$0xff]
    %v162 = vld [vmem:[%s1 + $0x300] sm:$0xff]
    %v163 = vld [vmem:[%s1 + $0x308] sm:$0xff]
    %v164 = vld [vmem:[%s2] sm:$0x1]
    %v166 = vperm.slane %v164, 0
    %vm168 = vcmask 130048
    %v170 = vsel %vm168, %v65, 0
    %172 = vmatpush.msra.mxu0 %v81
    %173 = vmatpush.msra.mxu0 %v80
    %174 = vmatpush.msra.mxu0 %v79
    %175 = vmatpush.msra.mxu0 %v78
    %176 = vmatpush.msra.mxu0 %v77
    %177 = vmatpush.msra.mxu0 %v76
    %178 = vmatpush.msra.mxu0 %v75
    %179 = vmatpush.msra.mxu0 %v74
    %180 = vmatpush.msra.mxu0 %v73
    %181 = vmatpush.msra.mxu0 %v72
    %182 = vmatpush.msra.mxu0 %v71
    %183 = vmatpush.msra.mxu0 %v70
    %184 = vmatpush.msra.mxu0 %v69
    %185 = vmatpush.msra.mxu0 %v68
    %186 = vmatpush.msra.mxu0 %v67
    %187 = vmatpush.msra.mxu0 %v66
    %188 = vmatmul.f32.gmra.mxu0 %v59
    %v189 = vpop.f32.mrf.mxu0
    %v190 = vadd.f32 %v166, %v189
    %191 = vdwg.mxu0
    %192 = vmatpush.msra.mxu0 %v97
    %193 = vmatpush.msra.mxu0 %v96
    %194 = vmatpush.msra.mxu0 %v95
    %195 = vmatpush.msra.mxu0 %v94
    %196 = vmatpush.msra.mxu0 %v93
    %197 = vmatpush.msra.mxu0 %v92
    %198 = vmatpush.msra.mxu0 %v91
    %199 = vmatpush.msra.mxu0 %v90
    %200 = vmatpush.msra.mxu0 %v89
    %201 = vmatpush.msra.mxu0 %v88
    %202 = vmatpush.msra.mxu0 %v87
    %203 = vmatpush.msra.mxu0 %v86
    %204 = vmatpush.msra.mxu0 %v85
    %205 = vmatpush.msra.mxu0 %v84
    %206 = vmatpush.msra.mxu0 %v83
    %207 = vmatpush.msra.mxu0 %v82
    %208 = vmatmul.f32.gmra.mxu0 %v60
    %v209 = vpop.f32.mrf.mxu0
    %v210 = vadd.f32 %v190, %v209
    %211 = vdwg.mxu0
    %212 = vmatpush.msra.mxu0 %v113
    %213 = vmatpush.msra.mxu0 %v112
    %214 = vmatpush.msra.mxu0 %v111
    %215 = vmatpush.msra.mxu0 %v110
    %216 = vmatpush.msra.mxu0 %v109
    %217 = vmatpush.msra.mxu0 %v108
    %218 = vmatpush.msra.mxu0 %v107
    %219 = vmatpush.msra.mxu0 %v106
    %220 = vmatpush.msra.mxu0 %v105
    %221 = vmatpush.msra.mxu0 %v104
    %222 = vmatpush.msra.mxu0 %v103
    %223 = vmatpush.msra.mxu0 %v102
    %224 = vmatpush.msra.mxu0 %v101
    %225 = vmatpush.msra.mxu0 %v100
    %226 = vmatpush.msra.mxu0 %v99
    %227 = vmatpush.msra.mxu0 %v98
    %228 = vmatmul.f32.gmra.mxu0 %v61
    %v229 = vpop.f32.mrf.mxu0
    %v230 = vadd.f32 %v210, %v229
    %231 = vdwg.mxu0
    %232 = vmatpush.msra.mxu0 %v129
    %233 = vmatpush.msra.mxu0 %v128
    %234 = vmatpush.msra.mxu0 %v127
    %235 = vmatpush.msra.mxu0 %v126
    %236 = vmatpush.msra.mxu0 %v125
    %237 = vmatpush.msra.mxu0 %v124
    %238 = vmatpush.msra.mxu0 %v123
    %239 = vmatpush.msra.mxu0 %v122
    %240 = vmatpush.msra.mxu0 %v121
    %241 = vmatpush.msra.mxu0 %v120
    %242 = vmatpush.msra.mxu0 %v119
    %243 = vmatpush.msra.mxu0 %v118
    %244 = vmatpush.msra.mxu0 %v117
    %245 = vmatpush.msra.mxu0 %v116
    %246 = vmatpush.msra.mxu0 %v115
    %247 = vmatpush.msra.mxu0 %v114
    %248 = vmatmul.f32.gmra.mxu0 %v62
    %v249 = vpop.f32.mrf.mxu0
    %v250 = vadd.f32 %v230, %v249
    %251 = vdwg.mxu0
    %252 = vmatpush.msra.mxu0 %v145
    %253 = vmatpush.msra.mxu0 %v144
    %254 = vmatpush.msra.mxu0 %v143
    %255 = vmatpush.msra.mxu0 %v142
    %256 = vmatpush.msra.mxu0 %v141
    %257 = vmatpush.msra.mxu0 %v140
    %258 = vmatpush.msra.mxu0 %v139
    %259 = vmatpush.msra.mxu0 %v138
    %260 = vmatpush.msra.mxu0 %v137
    %261 = vmatpush.msra.mxu0 %v136
    %262 = vmatpush.msra.mxu0 %v135
    %263 = vmatpush.msra.mxu0 %v134
    %264 = vmatpush.msra.mxu0 %v133
    %265 = vmatpush.msra.mxu0 %v132
    %266 = vmatpush.msra.mxu0 %v131
    %267 = vmatpush.msra.mxu0 %v130
    %268 = vmatmul.f32.gmra.mxu0 %v63
    %v269 = vpop.f32.mrf.mxu0
    %v270 = vadd.f32 %v250, %v269
    %271 = vdwg.mxu0
    %272 = vmatpush.msra.mxu0 %v161
    %273 = vmatpush.msra.mxu0 %v160
    %274 = vmatpush.msra.mxu0 %v159
    %275 = vmatpush.msra.mxu0 %v158
    %276 = vmatpush.msra.mxu0 %v157
    %277 = vmatpush.msra.mxu0 %v156
    %278 = vmatpush.msra.mxu0 %v155
    %279 = vmatpush.msra.mxu0 %v154
    %280 = vmatpush.msra.mxu0 %v153
    %281 = vmatpush.msra.mxu0 %v152
    %282 = vmatpush.msra.mxu0 %v151
    %283 = vmatpush.msra.mxu0 %v150
    %284 = vmatpush.msra.mxu0 %v149
    %285 = vmatpush.msra.mxu0 %v148
    %286 = vmatpush.msra.mxu0 %v147
    %287 = vmatpush.msra.mxu0 %v146
    %288 = vmatmul.f32.gmra.mxu0 %v64
    %v289 = vpop.f32.mrf.mxu0
    %v290 = vadd.f32 %v270, %v289
    %291 = vdwg.mxu0
    %292 = vmatpush.msra.mxu0 0.0
    %293 = vmatpush.msra.mxu0 0.0
    %294 = vmatpush.msra.mxu0 0.0
    %295 = vmatpush.msra.mxu0 0.0
    %296 = vmatpush.msra.mxu0 0.0
    %297 = vmatpush.msra.mxu0 0.0
    %298 = vmatpush.msra.mxu0 0.0
    %299 = vmatpush.msra.mxu0 0.0
    %300 = vmatpush.msra.mxu0 0.0
    %301 = vmatpush.msra.mxu0 0.0
    %302 = vmatpush.msra.mxu0 0.0
    %303 = vmatpush.msra.mxu0 0.0
    %304 = vmatpush.msra.mxu0 0.0
    %305 = vmatpush.msra.mxu0 0.0
    %306 = vmatpush.msra.mxu0 %v163
    %307 = vmatpush.msra.mxu0 %v162
    %308 = vmatmul.f32.gmra.mxu0 %v170
    %v309 = vpop.f32.mrf.mxu0
    %v310 = vadd.f32 %v290, %v309
    %311 = vdwg.mxu0
    %v312 = vtanh.pop %v310
    %v313 = vld [vmem:[%s3] sm:$0xff]
    %v314 = vld [vmem:[%s3 + $0x8] sm:$0xff]
    %v315 = vld [vmem:[%s3 + $0x10] sm:$0xff]
    %v316 = vld [vmem:[%s3 + $0x18] sm:$0xff]
    %v317 = vld [vmem:[%s3 + $0x20] sm:$0xff]
    %v318 = vld [vmem:[%s3 + $0x28] sm:$0xff]
    %v319 = vld [vmem:[%s3 + $0x30] sm:$0xff]
    %v320 = vld [vmem:[%s3 + $0x38] sm:$0xff]
    %v321 = vld [vmem:[%s3 + $0x40] sm:$0xff]
    %v322 = vld [vmem:[%s3 + $0x48] sm:$0xff]
    %v323 = vld [vmem:[%s3 + $0x50] sm:$0xff]
    %v324 = vld [vmem:[%s3 + $0x58] sm:$0xff]
    %v325 = vld [vmem:[%s3 + $0x60] sm:$0xff]
    %v326 = vld [vmem:[%s3 + $0x68] sm:$0xff]
    %v327 = vld [vmem:[%s3 + $0x70] sm:$0xff]
    %v328 = vld [vmem:[%s3 + $0x78] sm:$0xff]
    %v329 = vld [vmem:[%s4] sm:$0x1]
    %v331 = vperm.slane %v329, 0
    %333 = vmatpush.msra.mxu0 %v328
    %334 = vmatpush.msra.mxu0 %v327
    %335 = vmatpush.msra.mxu0 %v326
    %336 = vmatpush.msra.mxu0 %v325
    %337 = vmatpush.msra.mxu0 %v324
    %338 = vmatpush.msra.mxu0 %v323
    %339 = vmatpush.msra.mxu0 %v322
    %340 = vmatpush.msra.mxu0 %v321
    %341 = vmatpush.msra.mxu0 %v320
    %342 = vmatpush.msra.mxu0 %v319
    %343 = vmatpush.msra.mxu0 %v318
    %344 = vmatpush.msra.mxu0 %v317
    %345 = vmatpush.msra.mxu0 %v316
    %346 = vmatpush.msra.mxu0 %v315
    %347 = vmatpush.msra.mxu0 %v314
    %348 = vmatpush.msra.mxu0 %v313
    %349 = vmatmul.f32.gmra.mxu0 %v312
    %v350 = vpop.f32.mrf.mxu0
    %v351 = vadd.f32 %v331, %v350
    %352 = vdwg.mxu0
    %v353 = vtanh.pop %v351
    %v354 = vld [vmem:[%s5] sm:$0xff]
    %v355 = vld [vmem:[%s5 + $0x8] sm:$0xff]
    %v356 = vld [vmem:[%s5 + $0x10] sm:$0xff]
    %v357 = vld [vmem:[%s5 + $0x18] sm:$0xff]
    %v358 = vld [vmem:[%s5 + $0x20] sm:$0xff]
    %v359 = vld [vmem:[%s5 + $0x28] sm:$0xff]
    %v360 = vld [vmem:[%s5 + $0x30] sm:$0xff]
    %v361 = vld [vmem:[%s5 + $0x38] sm:$0xff]
    %v362 = vld [vmem:[%s6] sm:$0x1]
    %v364 = vperm.slane %v362, 0
    %vm366 = vcmask 523264
    %v368 = vsel %vm366, %v353, 0
    %370 = vmatpush.msra.mxu0 0.0
    %371 = vmatpush.msra.mxu0 0.0
    %372 = vmatpush.msra.mxu0 0.0
    %373 = vmatpush.msra.mxu0 0.0
    %374 = vmatpush.msra.mxu0 0.0
    %375 = vmatpush.msra.mxu0 0.0
    %376 = vmatpush.msra.mxu0 0.0
    %377 = vmatpush.msra.mxu0 0.0
    %378 = vmatpush.msra.mxu0 %v361
    %379 = vmatpush.msra.mxu0 %v360
    %380 = vmatpush.msra.mxu0 %v359
    %381 = vmatpush.msra.mxu0 %v358
    %382 = vmatpush.msra.mxu0 %v357
    %383 = vmatpush.msra.mxu0 %v356
    %384 = vmatpush.msra.mxu0 %v355
    %385 = vmatpush.msra.mxu0 %v354
    %386 = vmatmul.f32.gmra.mxu0 %v368
    %v387 = vpop.f32.mrf.mxu0
    %v388 = vadd.f32 %v364, %v387
    %389 = vdwg.mxu0
    %v390 = vtanh.pop %v388
    %v391 = vld [vmem:[%s7] sm:$0xff]
    %v392 = vld [vmem:[%s7 + $0x8] sm:$0xf]
    %v393 = vld [vmem:[%s8] sm:$0x1]
    %v395 = vperm.slane %v393, 0
    %vm397 = vcmask 97280
    %v399 = vsel %vm397, %v390, 0
    %vm401 = vcmask 1043456
    %v403 = vsel %vm401, %v392, 0
    %405 = vmatpush.msra.mxu0 0.0
    %406 = vmatpush.msra.mxu0 0.0
    %407 = vmatpush.msra.mxu0 0.0
    %408 = vmatpush.msra.mxu0 0.0
    %409 = vmatpush.msra.mxu0 0.0
    %410 = vmatpush.msra.mxu0 0.0
    %411 = vmatpush.msra.mxu0 0.0
    %412 = vmatpush.msra.mxu0 0.0
    %413 = vmatpush.msra.mxu0 0.0
    %414 = vmatpush.msra.mxu0 0.0
    %415 = vmatpush.msra.mxu0 0.0
    %416 = vmatpush.msra.mxu0 0.0
    %417 = vmatpush.msra.mxu0 0.0
    %418 = vmatpush.msra.mxu0 0.0
    %419 = vmatpush.msra.mxu0 %v403
    %420 = vmatpush.msra.mxu0 %v391
    %421 = vmatmul.f32.gmra.mxu0 %v399
    %v422 = vpop.f32.mrf.mxu0
    %v423 = vadd.f32 %v395, %v422
    %424 = vdwg.mxu0
    %v425 = vld [vmem:[%s9] sm:$0xff]
    %v426 = vld [vmem:[%s9 + $0x8] sm:$0xff]
    %v427 = vld [vmem:[%s9 + $0x10] sm:$0xff]
    %v428 = vld [vmem:[%s9 + $0x18] sm:$0xff]
    %v429 = vld [vmem:[%s9 + $0x20] sm:$0xff]
    %v430 = vld [vmem:[%s9 + $0x28] sm:$0xff]
    %v431 = vld [vmem:[%s9 + $0x30] sm:$0xff]
    %v432 = vld [vmem:[%s9 + $0x38] sm:$0xff]
    %v433 = vld [vmem:[%s9 + $0x40] sm:$0xff]
    %v434 = vld [vmem:[%s9 + $0x48] sm:$0xff]
    %v435 = vld [vmem:[%s9 + $0x50] sm:$0xff]
    %v436 = vld [vmem:[%s9 + $0x58] sm:$0xff]
    %v437 = vld [vmem:[%s9 + $0x60] sm:$0xff]
    %v438 = vld [vmem:[%s9 + $0x68] sm:$0xff]
    %v439 = vld [vmem:[%s9 + $0x70] sm:$0xff]
    %v440 = vld [vmem:[%s9 + $0x78] sm:$0xff]
    %v441 = vld [vmem:[%s10] sm:$0x1]
    %v443 = vperm.slane %v441, 0
    %445 = vmatpush.msra.mxu0 %v440
    %446 = vmatpush.msra.mxu0 %v439
    %447 = vmatpush.msra.mxu0 %v438
    %448 = vmatpush.msra.mxu0 %v437
    %449 = vmatpush.msra.mxu0 %v436
    %450 = vmatpush.msra.mxu0 %v435
    %451 = vmatpush.msra.mxu0 %v434
    %452 = vmatpush.msra.mxu0 %v433
    %453 = vmatpush.msra.mxu0 %v432
    %454 = vmatpush.msra.mxu0 %v431
    %455 = vmatpush.msra.mxu0 %v430
    %456 = vmatpush.msra.mxu0 %v429
    %457 = vmatpush.msra.mxu0 %v428
    %458 = vmatpush.msra.mxu0 %v427
    %459 = vmatpush.msra.mxu0 %v426
    %460 = vmatpush.msra.mxu0 %v425
    %461 = vmatmul.f32.gmra.mxu0 %v423
    %v462 = vpop.f32.mrf.mxu0
    %v463 = vadd.f32 %v443, %v462
    %464 = vdwg.mxu0
    %v465 = vtanh.pop %v463
    %v466 = vld [vmem:[%s11] sm:$0xff]
    %v467 = vld [vmem:[%s11 + $0x8] sm:$0xf]
    %v468 = vld [vmem:[%s12] sm:$0x1]
    %v470 = vperm.slane %v468, 0
    %v473 = vsel %vm397, %v465, 0
    %v476 = vsel %vm401, %v467, 0
    %478 = vmatpush.msra.mxu0 0.0
    %479 = vmatpush.msra.mxu0 0.0
    %480 = vmatpush.msra.mxu0 0.0
    %481 = vmatpush.msra.mxu0 0.0
    %482 = vmatpush.msra.mxu0 0.0
    %483 = vmatpush.msra.mxu0 0.0
    %484 = vmatpush.msra.mxu0 0.0
    %485 = vmatpush.msra.mxu0 0.0
    %486 = vmatpush.msra.mxu0 0.0
    %487 = vmatpush.msra.mxu0 0.0
    %488 = vmatpush.msra.mxu0 0.0
    %489 = vmatpush.msra.mxu0 0.0
    %490 = vmatpush.msra.mxu0 0.0
    %491 = vmatpush.msra.mxu0 0.0
    %492 = vmatpush.msra.mxu0 %v476
    %493 = vmatpush.msra.mxu0 %v466
    %494 = vmatmul.f32.gmra.mxu0 %v473
    %v495 = vpop.f32.mrf.mxu0
    %v496 = vadd.f32 %v470, %v495
    %497 = vdwg.mxu0
    %v498 = vtanh.pop %v496
    %v499 = vld [vmem:[%s13] sm:$0xff]
    %v500 = vld [vmem:[%s13 + $0x8] sm:$0xff]
    %v501 = vld [vmem:[%s13 + $0x10] sm:$0xff]
    %v502 = vld [vmem:[%s13 + $0x18] sm:$0xff]
    %v503 = vld [vmem:[%s13 + $0x20] sm:$0xff]
    %v504 = vld [vmem:[%s13 + $0x28] sm:$0xff]
    %v505 = vld [vmem:[%s13 + $0x30] sm:$0xff]
    %v506 = vld [vmem:[%s13 + $0x38] sm:$0xff]
    %v507 = vld [vmem:[%s14] sm:$0x1]
    %v509 = vperm.slane %v507, 0
    %v512 = vsel %vm366, %v498, 0
    %514 = vmatpush.msra.mxu0 0.0
    %515 = vmatpush.msra.mxu0 0.0
    %516 = vmatpush.msra.mxu0 0.0
    %517 = vmatpush.msra.mxu0 0.0
    %518 = vmatpush.msra.mxu0 0.0
    %519 = vmatpush.msra.mxu0 0.0
    %520 = vmatpush.msra.mxu0 0.0
    %521 = vmatpush.msra.mxu0 0.0
    %522 = vmatpush.msra.mxu0 %v506
    %523 = vmatpush.msra.mxu0 %v505
    %524 = vmatpush.msra.mxu0 %v504
    %525 = vmatpush.msra.mxu0 %v503
    %526 = vmatpush.msra.mxu0 %v502
    %527 = vmatpush.msra.mxu0 %v501
    %528 = vmatpush.msra.mxu0 %v500
    %529 = vmatpush.msra.mxu0 %v499
    %530 = vmatmul.f32.gmra.mxu0 %v512
    %v531 = vpop.f32.mrf.mxu0
    %v532 = vadd.f32 %v509, %v531
    %533 = vdwg.mxu0
    %v534 = vtanh.pop %v532
    %v535 = vld [vmem:[%s15] sm:$0xff]
    %v536 = vld [vmem:[%s15 + $0x8] sm:$0xff]
    %v537 = vld [vmem:[%s15 + $0x10] sm:$0xff]
    %v538 = vld [vmem:[%s15 + $0x18] sm:$0xff]
    %v539 = vld [vmem:[%s15 + $0x20] sm:$0xff]
    %v540 = vld [vmem:[%s15 + $0x28] sm:$0xff]
    %v541 = vld [vmem:[%s15 + $0x30] sm:$0xff]
    %v542 = vld [vmem:[%s15 + $0x38] sm:$0xff]
    %v543 = vld [vmem:[%s15 + $0x40] sm:$0xff]
    %v544 = vld [vmem:[%s15 + $0x48] sm:$0xff]
    %v545 = vld [vmem:[%s15 + $0x50] sm:$0xff]
    %v546 = vld [vmem:[%s15 + $0x58] sm:$0xff]
    %v547 = vld [vmem:[%s15 + $0x60] sm:$0xff]
    %v548 = vld [vmem:[%s15 + $0x68] sm:$0xff]
    %v549 = vld [vmem:[%s15 + $0x70] sm:$0xff]
    %v550 = vld [vmem:[%s15 + $0x78] sm:$0xff]
    %v551 = vld [vmem:[%s15 + $0x80] sm:$0xff]
    %v552 = vld [vmem:[%s15 + $0x88] sm:$0xff]
    %v553 = vld [vmem:[%s15 + $0x90] sm:$0xff]
    %v554 = vld [vmem:[%s15 + $0x98] sm:$0xff]
    %v555 = vld [vmem:[%s15 + $0xa0] sm:$0xff]
    %v556 = vld [vmem:[%s15 + $0xa8] sm:$0xff]
    %v557 = vld [vmem:[%s15 + $0xb0] sm:$0xff]
    %v558 = vld [vmem:[%s15 + $0xb8] sm:$0xff]
    %v559 = vld [vmem:[%s15 + $0xc0] sm:$0xff]
    %v560 = vld [vmem:[%s15 + $0xc8] sm:$0xff]
    %v561 = vld [vmem:[%s15 + $0xd0] sm:$0xff]
    %v562 = vld [vmem:[%s15 + $0xd8] sm:$0xff]
    %v563 = vld [vmem:[%s15 + $0xe0] sm:$0xff]
    %v564 = vld [vmem:[%s15 + $0xe8] sm:$0xff]
    %v565 = vld [vmem:[%s15 + $0xf0] sm:$0xff]
    %v566 = vld [vmem:[%s15 + $0xf8] sm:$0xff]
    %v567 = vld [vmem:[%s15 + $0x100] sm:$0xff]
    %v568 = vld [vmem:[%s15 + $0x108] sm:$0xff]
    %v569 = vld [vmem:[%s15 + $0x110] sm:$0xff]
    %v570 = vld [vmem:[%s15 + $0x118] sm:$0xff]
    %v571 = vld [vmem:[%s15 + $0x120] sm:$0xff]
    %v572 = vld [vmem:[%s15 + $0x128] sm:$0xff]
    %v573 = vld [vmem:[%s15 + $0x130] sm:$0xff]
    %v574 = vld [vmem:[%s15 + $0x138] sm:$0xff]
    %v575 = vld [vmem:[%s15 + $0x140] sm:$0xff]
    %v576 = vld [vmem:[%s15 + $0x148] sm:$0xff]
    %v577 = vld [vmem:[%s15 + $0x150] sm:$0xff]
    %v578 = vld [vmem:[%s15 + $0x158] sm:$0xff]
    %v579 = vld [vmem:[%s15 + $0x160] sm:$0xff]
    %v580 = vld [vmem:[%s15 + $0x168] sm:$0xff]
    %v581 = vld [vmem:[%s15 + $0x170] sm:$0xff]
    %v582 = vld [vmem:[%s15 + $0x178] sm:$0xff]
    %v583 = vld [vmem:[%s15 + $0x180] sm:$0xff]
    %v584 = vld [vmem:[%s15 + $0x188] sm:$0xff]
    %v585 = vld [vmem:[%s15 + $0x190] sm:$0xff]
    %v586 = vld [vmem:[%s15 + $0x198] sm:$0xff]
    %v587 = vld [vmem:[%s15 + $0x1a0] sm:$0xff]
    %v588 = vld [vmem:[%s15 + $0x1a8] sm:$0xff]
    %v589 = vld [vmem:[%s15 + $0x1b0] sm:$0xff]
    %v590 = vld [vmem:[%s15 + $0x1b8] sm:$0xff]
    %v591 = vld [vmem:[%s15 + $0x1c0] sm:$0xff]
    %v592 = vld [vmem:[%s15 + $0x1c8] sm:$0xff]
    %v593 = vld [vmem:[%s15 + $0x1d0] sm:$0xff]
    %v594 = vld [vmem:[%s15 + $0x1d8] sm:$0xff]
    %v595 = vld [vmem:[%s15 + $0x1e0] sm:$0xff]
    %v596 = vld [vmem:[%s15 + $0x1e8] sm:$0xff]
    %v597 = vld [vmem:[%s15 + $0x1f0] sm:$0xff]
    %v598 = vld [vmem:[%s15 + $0x1f8] sm:$0xff]
    %v599 = vld [vmem:[%s15 + $0x200] sm:$0xff]
    %v600 = vld [vmem:[%s15 + $0x208] sm:$0xff]
    %v601 = vld [vmem:[%s15 + $0x210] sm:$0xff]
    %v602 = vld [vmem:[%s15 + $0x218] sm:$0xff]
    %v603 = vld [vmem:[%s15 + $0x220] sm:$0xff]
    %v604 = vld [vmem:[%s15 + $0x228] sm:$0xff]
    %v605 = vld [vmem:[%s15 + $0x230] sm:$0xff]
    %v606 = vld [vmem:[%s15 + $0x238] sm:$0xff]
    %v607 = vld [vmem:[%s15 + $0x240] sm:$0xff]
    %v608 = vld [vmem:[%s15 + $0x248] sm:$0xff]
    %v609 = vld [vmem:[%s15 + $0x250] sm:$0xff]
    %v610 = vld [vmem:[%s15 + $0x258] sm:$0xff]
    %v611 = vld [vmem:[%s15 + $0x260] sm:$0xff]
    %v612 = vld [vmem:[%s15 + $0x268] sm:$0xff]
    %v613 = vld [vmem:[%s15 + $0x270] sm:$0xff]
    %v614 = vld [vmem:[%s15 + $0x278] sm:$0xff]
    %v615 = vld [vmem:[%s15 + $0x280] sm:$0xff]
    %v616 = vld [vmem:[%s15 + $0x288] sm:$0xff]
    %v617 = vld [vmem:[%s15 + $0x290] sm:$0xff]
    %v618 = vld [vmem:[%s15 + $0x298] sm:$0xff]
    %v619 = vld [vmem:[%s15 + $0x2a0] sm:$0xff]
    %v620 = vld [vmem:[%s15 + $0x2a8] sm:$0xff]
    %v621 = vld [vmem:[%s15 + $0x2b0] sm:$0xff]
    %v622 = vld [vmem:[%s15 + $0x2b8] sm:$0xff]
    %v623 = vld [vmem:[%s15 + $0x2c0] sm:$0xff]
    %v624 = vld [vmem:[%s15 + $0x2c8] sm:$0xff]
    %v625 = vld [vmem:[%s15 + $0x2d0] sm:$0xff]
    %v626 = vld [vmem:[%s15 + $0x2d8] sm:$0xff]
    %v627 = vld [vmem:[%s15 + $0x2e0] sm:$0xff]
    %v628 = vld [vmem:[%s15 + $0x2e8] sm:$0xff]
    %v629 = vld [vmem:[%s15 + $0x2f0] sm:$0xff]
    %v630 = vld [vmem:[%s15 + $0x2f8] sm:$0xff]
    %v631 = vld [vmem:[%s15 + $0x300] sm:$0xff]
    %v632 = vld [vmem:[%s15 + $0x308] sm:$0xff]
    %v633 = vld [vmem:[%s15 + $0x310] sm:$0xff]
    %v634 = vld [vmem:[%s15 + $0x318] sm:$0xff]
    %v635 = vld [vmem:[%s15 + $0x320] sm:$0xff]
    %v636 = vld [vmem:[%s15 + $0x328] sm:$0xff]
    %v637 = vld [vmem:[%s15 + $0x330] sm:$0xff]
    %v638 = vld [vmem:[%s15 + $0x338] sm:$0xff]
    %v639 = vld [vmem:[%s15 + $0x340] sm:$0xff]
    %v640 = vld [vmem:[%s15 + $0x348] sm:$0xff]
    %v641 = vld [vmem:[%s15 + $0x350] sm:$0xff]
    %v642 = vld [vmem:[%s15 + $0x358] sm:$0xff]
    %v643 = vld [vmem:[%s15 + $0x360] sm:$0xff]
    %v644 = vld [vmem:[%s15 + $0x368] sm:$0xff]
    %v645 = vld [vmem:[%s15 + $0x370] sm:$0xff]
    %v646 = vld [vmem:[%s15 + $0x378] sm:$0xff]
    %v647 = vld [vmem:[%s16] sm:$0x7f]
    %v649 = vperm.slane %v647, 0
    %v650 = vperm.slane %v647, 1
    %v651 = vperm.slane %v647, 2
    %v652 = vperm.slane %v647, 3
    %v653 = vperm.slane %v647, 4
    %v654 = vperm.slane %v647, 5
    %v655 = vperm.slane %v647, 6
    %663 = vmatpush.msra.mxu0 %v640
    %664 = vmatpush.msra.mxu0 %v633
    %665 = vmatpush.msra.mxu0 %v626
    %666 = vmatpush.msra.mxu0 %v619
    %667 = vmatpush.msra.mxu0 %v612
    %668 = vmatpush.msra.mxu0 %v605
    %669 = vmatpush.msra.mxu0 %v598
    %670 = vmatpush.msra.mxu0 %v591
    %671 = vmatpush.msra.mxu0 %v584
    %672 = vmatpush.msra.mxu0 %v577
    %673 = vmatpush.msra.mxu0 %v570
    %674 = vmatpush.msra.mxu0 %v563
    %675 = vmatpush.msra.mxu0 %v556
    %676 = vmatpush.msra.mxu0 %v549
    %677 = vmatpush.msra.mxu0 %v542
    %678 = vmatpush.msra.mxu0 %v535
    %679 = vmatmul.f32.gmra.mxu0 %v534
    %v680 = vpop.f32.mrf.mxu0
    %v681 = vadd.f32 %v649, %v680
    %682 = vdwg.mxu0
    %683 = vmatpush.msra.mxu0 %v641
    %684 = vmatpush.msra.mxu0 %v634
    %685 = vmatpush.msra.mxu0 %v627
    %686 = vmatpush.msra.mxu0 %v620
    %687 = vmatpush.msra.mxu0 %v613
    %688 = vmatpush.msra.mxu0 %v606
    %689 = vmatpush.msra.mxu0 %v599
    %690 = vmatpush.msra.mxu0 %v592
    %691 = vmatpush.msra.mxu0 %v585
    %692 = vmatpush.msra.mxu0 %v578
    %693 = vmatpush.msra.mxu0 %v571
    %694 = vmatpush.msra.mxu0 %v564
    %695 = vmatpush.msra.mxu0 %v557
    %696 = vmatpush.msra.mxu0 %v550
    %697 = vmatpush.msra.mxu0 %v543
    %698 = vmatpush.msra.mxu0 %v536
    %699 = vmatmul.f32.gmra.mxu0 %v534
    %v700 = vpop.f32.mrf.mxu0
    %v701 = vadd.f32 %v650, %v700
    %702 = vdwg.mxu0
    %703 = vmatpush.msra.mxu0 %v642
    %704 = vmatpush.msra.mxu0 %v635
    %705 = vmatpush.msra.mxu0 %v628
    %706 = vmatpush.msra.mxu0 %v621
    %707 = vmatpush.msra.mxu0 %v614
    %708 = vmatpush.msra.mxu0 %v607
    %709 = vmatpush.msra.mxu0 %v600
    %710 = vmatpush.msra.mxu0 %v593
    %711 = vmatpush.msra.mxu0 %v586
    %712 = vmatpush.msra.mxu0 %v579
    %713 = vmatpush.msra.mxu0 %v572
    %714 = vmatpush.msra.mxu0 %v565
    %715 = vmatpush.msra.mxu0 %v558
    %716 = vmatpush.msra.mxu0 %v551
    %717 = vmatpush.msra.mxu0 %v544
    %718 = vmatpush.msra.mxu0 %v537
    %719 = vmatmul.f32.gmra.mxu0 %v534
    %v720 = vpop.f32.mrf.mxu0
    %v721 = vadd.f32 %v651, %v720
    %722 = vdwg.mxu0
    %723 = vmatpush.msra.mxu0 %v643
    %724 = vmatpush.msra.mxu0 %v636
    %725 = vmatpush.msra.mxu0 %v629
    %726 = vmatpush.msra.mxu0 %v622
    %727 = vmatpush.msra.mxu0 %v615
    %728 = vmatpush.msra.mxu0 %v608
    %729 = vmatpush.msra.mxu0 %v601
    %730 = vmatpush.msra.mxu0 %v594
    %731 = vmatpush.msra.mxu0 %v587
    %732 = vmatpush.msra.mxu0 %v580
    %733 = vmatpush.msra.mxu0 %v573
    %734 = vmatpush.msra.mxu0 %v566
    %735 = vmatpush.msra.mxu0 %v559
    %736 = vmatpush.msra.mxu0 %v552
    %737 = vmatpush.msra.mxu0 %v545
    %738 = vmatpush.msra.mxu0 %v538
    %739 = vmatmul.f32.gmra.mxu0 %v534
    %v740 = vpop.f32.mrf.mxu0
    %v741 = vadd.f32 %v652, %v740
    %742 = vdwg.mxu0
    %743 = vmatpush.msra.mxu0 %v644
    %744 = vmatpush.msra.mxu0 %v637
    %745 = vmatpush.msra.mxu0 %v630
    %746 = vmatpush.msra.mxu0 %v623
    %747 = vmatpush.msra.mxu0 %v616
    %748 = vmatpush.msra.mxu0 %v609
    %749 = vmatpush.msra.mxu0 %v602
    %750 = vmatpush.msra.mxu0 %v595
    %751 = vmatpush.msra.mxu0 %v588
    %752 = vmatpush.msra.mxu0 %v581
    %753 = vmatpush.msra.mxu0 %v574
    %754 = vmatpush.msra.mxu0 %v567
    %755 = vmatpush.msra.mxu0 %v560
    %756 = vmatpush.msra.mxu0 %v553
    %757 = vmatpush.msra.mxu0 %v546
    %758 = vmatpush.msra.mxu0 %v539
    %759 = vmatmul.f32.gmra.mxu0 %v534
    %v760 = vpop.f32.mrf.mxu0
    %v761 = vadd.f32 %v653, %v760
    %762 = vdwg.mxu0
    %763 = vmatpush.msra.mxu0 %v645
    %764 = vmatpush.msra.mxu0 %v638
    %765 = vmatpush.msra.mxu0 %v631
    %766 = vmatpush.msra.mxu0 %v624
    %767 = vmatpush.msra.mxu0 %v617
    %768 = vmatpush.msra.mxu0 %v610
    %769 = vmatpush.msra.mxu0 %v603
    %770 = vmatpush.msra.mxu0 %v596
    %771 = vmatpush.msra.mxu0 %v589
    %772 = vmatpush.msra.mxu0 %v582
    %773 = vmatpush.msra.mxu0 %v575
    %774 = vmatpush.msra.mxu0 %v568
    %775 = vmatpush.msra.mxu0 %v561
    %776 = vmatpush.msra.mxu0 %v554
    %777 = vmatpush.msra.mxu0 %v547
    %778 = vmatpush.msra.mxu0 %v540
    %779 = vmatmul.f32.gmra.mxu0 %v534
    %v780 = vpop.f32.mrf.mxu0
    %v781 = vadd.f32 %v654, %v780
    %782 = vdwg.mxu0
    %783 = vmatpush.msra.mxu0 %v646
    %784 = vmatpush.msra.mxu0 %v639
    %785 = vmatpush.msra.mxu0 %v632
    %786 = vmatpush.msra.mxu0 %v625
    %787 = vmatpush.msra.mxu0 %v618
    %788 = vmatpush.msra.mxu0 %v611
    %789 = vmatpush.msra.mxu0 %v604
    %790 = vmatpush.msra.mxu0 %v597
    %791 = vmatpush.msra.mxu0 %v590
    %792 = vmatpush.msra.mxu0 %v583
    %793 = vmatpush.msra.mxu0 %v576
    %794 = vmatpush.msra.mxu0 %v569
    %795 = vmatpush.msra.mxu0 %v562
    %796 = vmatpush.msra.mxu0 %v555
    %797 = vmatpush.msra.mxu0 %v548
    %798 = vmatpush.msra.mxu0 %v541
    %799 = vmatmul.f32.gmra.mxu0 %v534
    %v800 = vpop.f32.mrf.mxu0
    %v801 = vadd.f32 %v655, %v800
    %802 = vdwg.mxu0
    %v803 = vxor.u32 %v681, 2147483648
    %v804 = vxor.u32 %v701, 2147483648
    %v805 = vxor.u32 %v721, 2147483648
    %v806 = vxor.u32 %v741, 2147483648
    %v807 = vxor.u32 %v761, 2147483648
    %v808 = vxor.u32 %v781, 2147483648
    %v809 = vxor.u32 %v801, 2147483648
    %v810 = vmul.f32 %v803, 1.442695
    %v811 = vpow.pop %v810
    %v812 = vmul.f32 %v804, 1.442695
    %v813 = vpow.pop %v812
    %v814 = vmul.f32 %v805, 1.442695
    %v815 = vpow.pop %v814
    %v816 = vmul.f32 %v806, 1.442695
    %v817 = vpow.pop %v816
    %v818 = vmul.f32 %v807, 1.442695
    %v819 = vpow.pop %v818
    %v820 = vmul.f32 %v808, 1.442695
    %v821 = vpow.pop %v820
    %v822 = vmul.f32 %v809, 1.442695
    %v823 = vpow.pop %v822
    %v824 = vadd.f32 %v811, 1.0
    %v825 = vadd.f32 %v813, 1.0
    %v826 = vadd.f32 %v815, 1.0
    %v827 = vadd.f32 %v817, 1.0
    %v828 = vadd.f32 %v819, 1.0
    %v829 = vadd.f32 %v821, 1.0
    %v830 = vadd.f32 %v823, 1.0
    %v831 = vrcp.pop %v824
    %v832 = vmul.f32 %v824, %v831
    %v833 = vsub.f32 1.0, %v832
    %v834 = vmul.f32 %v831, %v833
    %v835 = vadd.f32 %v831, %v834
    %vm836 = vweird.f32 %v824
    %vm837 = vweird.f32 %v831
    %vm838 = vmor %vm836, %vm837
    %v839 = vsel %vm838, %v831, %v835
    %v840 = vand.u32 2147483647, %v824
    %vm841 = vcmp.eq.f32.partialorder %v840, 8.507059e+37
    %v842 = vand.u32 %v824, 2147483648
    %v843 = vor.u32 1.1754944e-38, %v842
    %v844 = vsel %vm841, %v843, %v839
    %v845 = vmul.f32 1.0, %v844
    %v846 = vrcp.pop %v825
    %v847 = vmul.f32 %v825, %v846
    %v848 = vsub.f32 1.0, %v847
    %v849 = vmul.f32 %v846, %v848
    %v850 = vadd.f32 %v846, %v849
    %vm851 = vweird.f32 %v825
    %vm852 = vweird.f32 %v846
    %vm853 = vmor %vm851, %vm852
    %v854 = vsel %vm853, %v846, %v850
    %v855 = vand.u32 2147483647, %v825
    %vm856 = vcmp.eq.f32.partialorder %v855, 8.507059e+37
    %v857 = vand.u32 %v825, 2147483648
    %v858 = vor.u32 1.1754944e-38, %v857
    %v859 = vsel %vm856, %v858, %v854
    %v860 = vmul.f32 1.0, %v859
    %v861 = vrcp.pop %v826
    %v862 = vmul.f32 %v826, %v861
    %v863 = vsub.f32 1.0, %v862
    %v864 = vmul.f32 %v861, %v863
    %v865 = vadd.f32 %v861, %v864
    %vm866 = vweird.f32 %v826
    %vm867 = vweird.f32 %v861
    %vm868 = vmor %vm866, %vm867
    %v869 = vsel %vm868, %v861, %v865
    %v870 = vand.u32 2147483647, %v826
    %vm871 = vcmp.eq.f32.partialorder %v870, 8.507059e+37
    %v872 = vand.u32 %v826, 2147483648
    %v873 = vor.u32 1.1754944e-38, %v872
    %v874 = vsel %vm871, %v873, %v869
    %v875 = vmul.f32 1.0, %v874
    %v876 = vrcp.pop %v827
    %v877 = vmul.f32 %v827, %v876
    %v878 = vsub.f32 1.0, %v877
    %v879 = vmul.f32 %v876, %v878
    %v880 = vadd.f32 %v876, %v879
    %vm881 = vweird.f32 %v827
    %vm882 = vweird.f32 %v876
    %vm883 = vmor %vm881, %vm882
    %v884 = vsel %vm883, %v876, %v880
    %v885 = vand.u32 2147483647, %v827
    %vm886 = vcmp.eq.f32.partialorder %v885, 8.507059e+37
    %v887 = vand.u32 %v827, 2147483648
    %v888 = vor.u32 1.1754944e-38, %v887
    %v889 = vsel %vm886, %v888, %v884
    %v890 = vmul.f32 1.0, %v889
    %v891 = vrcp.pop %v828
    %v892 = vmul.f32 %v828, %v891
    %v893 = vsub.f32 1.0, %v892
    %v894 = vmul.f32 %v891, %v893
    %v895 = vadd.f32 %v891, %v894
    %vm896 = vweird.f32 %v828
    %vm897 = vweird.f32 %v891
    %vm898 = vmor %vm896, %vm897
    %v899 = vsel %vm898, %v891, %v895
    %v900 = vand.u32 2147483647, %v828
    %vm901 = vcmp.eq.f32.partialorder %v900, 8.507059e+37
    %v902 = vand.u32 %v828, 2147483648
    %v903 = vor.u32 1.1754944e-38, %v902
    %v904 = vsel %vm901, %v903, %v899
    %v905 = vmul.f32 1.0, %v904
    %v906 = vrcp.pop %v829
    %v907 = vmul.f32 %v829, %v906
    %v908 = vsub.f32 1.0, %v907
    %v909 = vmul.f32 %v906, %v908
    %v910 = vadd.f32 %v906, %v909
    %vm911 = vweird.f32 %v829
    %vm912 = vweird.f32 %v906
    %vm913 = vmor %vm911, %vm912
    %v914 = vsel %vm913, %v906, %v910
    %v915 = vand.u32 2147483647, %v829
    %vm916 = vcmp.eq.f32.partialorder %v915, 8.507059e+37
    %v917 = vand.u32 %v829, 2147483648
    %v918 = vor.u32 1.1754944e-38, %v917
    %v919 = vsel %vm916, %v918, %v914
    %v920 = vmul.f32 1.0, %v919
    %v921 = vrcp.pop %v830
    %v922 = vmul.f32 %v830, %v921
    %v923 = vsub.f32 1.0, %v922
    %v924 = vmul.f32 %v921, %v923
    %v925 = vadd.f32 %v921, %v924
    %vm926 = vweird.f32 %v830
    %vm927 = vweird.f32 %v921
    %vm928 = vmor %vm926, %vm927
    %v929 = vsel %vm928, %v921, %v925
    %v930 = vand.u32 2147483647, %v830
    %vm931 = vcmp.eq.f32.partialorder %v930, 8.507059e+37
    %v932 = vand.u32 %v830, 2147483648
    %v933 = vor.u32 1.1754944e-38, %v932
    %v934 = vsel %vm931, %v933, %v929
    %v935 = vmul.f32 1.0, %v934
    %936 = vst [vmem:[%s17] sm:$0xff] %v423
    %937 = vst [vmem:[#allocation2] sm:$0xff] %v845
    %938 = vst [vmem:[#allocation2 + $0x8] sm:$0xff] %v860
    %939 = vst [vmem:[#allocation2 + $0x10] sm:$0xff] %v875
    %940 = vst [vmem:[#allocation2 + $0x18] sm:$0xff] %v890
    %941 = vst [vmem:[#allocation2 + $0x20] sm:$0xff] %v905
    %942 = vst [vmem:[#allocation2 + $0x28] sm:$0xff] %v920
    %943 = vst.msk [vmem:[#allocation2 + $0x30] sm:$0xff] %vm168, %v935
    // Predicated region
    $region70: #{autoencoder_forward.1} parent=1 // pred_check
      _
    $region71: #{autoencoder_forward.1} parent=1 // pred_check_branch
      %945 = sbr.rel (0) target = $region73
    $region72: #{autoencoder_forward.1} parent=1 // pred_region
      _
    $region73: #{autoencoder_forward.1} parent=1 // pred_fallthru
      _
    // Predicated region
    $region74: #{autoencoder_forward.1} parent=1 // pred_check
      _
    $region75: #{autoencoder_forward.1} parent=1 // pred_check_branch
      %947 = sbr.rel (0) target = $region77
    $region76: #{autoencoder_forward.1} parent=1 // pred_region
      %949 = vsyncadd [#allocation3], 0
      %s951 = sshll.u32 [#allocation2], 4
      %s952 = int_to_ptr.vmem [resolvable:$true] %s951
      %s953 = sshll.u32 %s18, 4
      %s954 = int_to_ptr.hbm [resolvable:$true] %s953
      %956 = dma.vmem_to_hbm [thread:$0]  %s952, 896, %s954, [#allocation3]
    $region77: #{autoencoder_forward.1} parent=1 // pred_fallthru
      _
    // Predicated region
    $region78: #{autoencoder_forward.1} parent=1 // pred_check
      _
    $region79: #{autoencoder_forward.1} parent=1 // pred_check_branch
      %958 = sbr.rel (0) target = $region81
    $region80: #{autoencoder_forward.1} parent=1 // pred_region
      _
    $region81: #{autoencoder_forward.1} parent=1 // pred_fallthru
      _
    // Predicated region
    $region82: #{autoencoder_forward.1} parent=1 // pred_check
      _
    $region83: #{autoencoder_forward.1} parent=1 // pred_check_branch
      %960 = sbr.rel (0) target = $region85
    $region84: #{autoencoder_forward.1} parent=1 // pred_region
      %962 = dma.done [#allocation3], 896
    $region85: #{autoencoder_forward.1} parent=1 // pred_fallthru
      _
    %963 = vsyncpa [#allocation3], 1

</llo_original>
